<compile_context>
chip_gen: v7x
topology: tpu7x:2x2x1
jax: 0.10.0
libtpu: 0.0.40
codegen_flags: <defaults>
</compile_context>

<pallas_src>
import functools

import jax
import jax.numpy as jnp
from jax.experimental import pallas as pl
from jax.experimental.pallas import tpu as pltpu


# ----------------------------------------------------------------------------
# Kernel 1: DiceLoss.forward equivalent (probabilities already given).
#   grid = (N, T, K)   N batch ("parallel"), T spatial tiles, K = class_num-1
#   prob_ref: (1, 1, block_rows, 128) f32   channel (k+1) spatial tile
#   tgt_ref:  (1, block_rows, 128)    int8  label tile (reused across k)
#   outputs:  three (1, K, 128) f32 partial-sum blocks, resident per batch n
# ----------------------------------------------------------------------------
def _dice_prob_kernel(prob_ref, tgt_ref, inter_ref, psum_ref, tsum_ref,
                      *, hw, needs_mask):
    t = pl.program_id(1)
    k = pl.program_id(2)

    @pl.when(jnp.logical_and(t == 0, k == 0))
    def _():
        inter_ref[...] = jnp.zeros_like(inter_ref)
        psum_ref[...] = jnp.zeros_like(psum_ref)
        tsum_ref[...] = jnp.zeros_like(tsum_ref)

    p = prob_ref[0, 0]                              # (block_rows, 128) f32
    labels = tgt_ref[0].astype(jnp.int32)           # widen int8 -> int32 on VPU
    class_id = k + 1                                # classes 1 .. class_num-1
    eqf = (labels == class_id).astype(jnp.float32)

    if needs_mask:
        block_rows, lanes = p.shape
        base = t * (block_rows * lanes)
        r = jax.lax.broadcasted_iota(jnp.int32, (block_rows, lanes), 0)
        c = jax.lax.broadcasted_iota(jnp.int32, (block_rows, lanes), 1)
        valid = (base + r * lanes + c) < hw
        # where() (not multiply) on p: over-covered tail bytes may be NaN/Inf.
        p = jnp.where(valid, p, jnp.float32(0.0))
        eqf = eqf * valid.astype(jnp.float32)

    inter_row = jnp.sum(p * eqf, axis=0, keepdims=True)   # (1, 128)
    psum_row = jnp.sum(p, axis=0, keepdims=True)
    tsum_row = jnp.sum(eqf, axis=0, keepdims=True)

    # One-hot row select (class k) avoids cross-sublane concat / dynamic stores.
    num_k = inter_ref.shape[1]
    sel = (jax.lax.broadcasted_iota(jnp.int32, (num_k, 128), 0) == k)
    self_f = sel.astype(jnp.float32)
    inter_ref[0] += self_f * inter_row
    psum_ref[0] += self_f * psum_row
    tsum_ref[0] += self_f * tsum_row


# ----------------------------------------------------------------------------
# Kernel 2: fused softmax + DiceLoss (for the `dice_loss(logits, target)` path)
#   grid = (N, T)
#   x_ref:   (1, C, block_rows, 128) f32   all logit channels of one tile
#   tgt_ref: (1, block_rows, 128)    int8
#   outputs: three (1, K, 128) f32 partial-sum blocks
# ----------------------------------------------------------------------------
def _dice_logits_kernel(x_ref, tgt_ref, inter_ref, psum_ref, tsum_ref,
                        *, class_num, hw, needs_mask):
    t = pl.program_id(1)

    @pl.when(t == 0)
    def _():
        inter_ref[...] = jnp.zeros_like(inter_ref)
        psum_ref[...] = jnp.zeros_like(psum_ref)
        tsum_ref[...] = jnp.zeros_like(tsum_ref)

    num_ch = x_ref.shape[1]
    labels = tgt_ref[0].astype(jnp.int32)
    xs = [x_ref[0, c] for c in range(num_ch)]       # each (block_rows, 128)
    block_rows, lanes = xs[0].shape

    validf = None
    if needs_mask:
        base = t * (block_rows * lanes)
        r = jax.lax.broadcasted_iota(jnp.int32, (block_rows, lanes), 0)
        c = jax.lax.broadcasted_iota(jnp.int32, (block_rows, lanes), 1)
        valid = (base + r * lanes + c) < hw
        validf = valid.astype(jnp.float32)
        # Clean garbage / zero-padded logits so exp() stays finite.
        xs = [jnp.where(valid, x, jnp.float32(0.0)) for x in xs]

    # Numerically-stable softmax over the (small, unrolled) channel axis.
    m = xs[0]
    for c in range(1, num_ch):
        m = jnp.maximum(m, xs[c])
    es = [jnp.exp(x - m) for x in xs]
    denom = es[0]
    for c in range(1, num_ch):
        denom = denom + es[c]
    inv = 1.0 / denom

    for i in range(1, class_num):                   # static unrolled class loop
        p = es[i] * inv
        eqf = (labels == i).astype(jnp.float32)
        if validf is not None:
            p = p * validf
            eqf = eqf * validf
        row = pl.ds(i - 1, 1)                       # static row offset
        inter_ref[0, row, :] += jnp.sum(p * eqf, axis=0, keepdims=True)
        psum_ref[0, row, :] += jnp.sum(p, axis=0, keepdims=True)
        tsum_ref[0, row, :] += jnp.sum(eqf, axis=0, keepdims=True)


# ----------------------------------------------------------------------------
# Wrappers
# ----------------------------------------------------------------------------
def _spatial_tiling(hw, max_block_rows):
    rows = -(-hw // 128)                            # lane-dense rows of 128
    if rows <= max_block_rows:
        block_rows = rows                           # full dim (exempt from 8x128)
    else:
        block_rows = max(32, (max_block_rows // 32) * 32)
    num_tiles = -(-rows // block_rows)
    needs_mask = (num_tiles * block_rows * 128) != hw
    return rows, block_rows, num_tiles, needs_mask


def _lane_dense(flat, hw, rows, pad_leading_dims):
    pad = rows * 128 - hw
    if pad:
        # TODO(synk): lane-dense reshape needs H*W % 128 == 0; this pad is one
        # extra copy (a 4-D (H, W)-tiled layout would avoid it for such shapes).
        flat = jnp.pad(flat, pad_leading_dims + ((0, pad),))
    return flat


def _dice_combine(inter_p, psum_p, tsum_p, class_num, smooth):
    inter = jnp.sum(inter_p, axis=(0, 2))           # (K,)
    union = jnp.sum(psum_p, axis=(0, 2)) + jnp.sum(tsum_p, axis=(0, 2))
    sm = jnp.float32(smooth)
    dice = (2.0 * inter + sm) / (union + sm)
    loss = jnp.sum(1.0 - dice) / jnp.float32(class_num - 1)
    return jnp.reshape(loss, (1,)).astype(jnp.float32)


def dice_loss_pallas(prob, target, *, class_num=2, smooth=1, max_block_rows=8192):
    """Pallas equivalent of DiceLoss(class_num, smooth)(prob, target).

    prob:   (N, C, H, W) float32 probabilities (already softmaxed over C).
    target: (N, H, W) integer class labels (class_num <= 127 assumed).
    Returns: (1,) float32 loss, matching the torch module's output shape.
    """
    prob = prob.astype(jnp.float32)
    # Narrow label stream: 1 B/elem.  (Ideally cast once in the data pipeline.)
    target = target.astype(jnp.int8)
    N, C, H, W = prob.shape
    assert 2 <= class_num <= 127 and C >= class_num
    K = class_num - 1
    HW = H * W

    rows, block_rows, T, needs_mask = _spatial_tiling(HW, max_block_rows)
    prob_tiles = _lane_dense(prob.reshape(N, C, HW), HW, rows,
                             ((0, 0), (0, 0))).reshape(N, C, rows, 128)
    tgt_tiles = _lane_dense(target.reshape(N, HW), HW, rows,
                            ((0, 0),)).reshape(N, rows, 128)

    kernel = functools.partial(_dice_prob_kernel, hw=HW, needs_mask=needs_mask)
    part_shape = jax.ShapeDtypeStruct((N, K, 128), jnp.float32)
    part_spec = pl.BlockSpec((1, K, 128), lambda n, t, k: (n, 0, 0))

    inter_p, psum_p, tsum_p = pl.pallas_call(
        kernel,
        out_shape=(part_shape, part_shape, part_shape),
        grid_spec=pltpu.PrefetchScalarGridSpec(
            num_scalar_prefetch=0,
            grid=(N, T, K),                         # K innermost: target reused
            in_specs=[
                # channel 0 (background) is never DMA'd (index offset +1)
                pl.BlockSpec((1, 1, block_rows, 128),
                             lambda n, t, k: (n, k + 1, t, 0)),
                pl.BlockSpec((1, block_rows, 128),
                             lambda n, t, k: (n, t, 0)),
            ],
            out_specs=[part_spec, part_spec, part_spec],
        ),
        compiler_params=pltpu.CompilerParams(
            dimension_semantics=("parallel", "arbitrary", "arbitrary"),
            vmem_limit_bytes=48 * 1024 * 1024,
        ),
    )(prob_tiles, tgt_tiles)

    return _dice_combine(inter_p, psum_p, tsum_p, class_num, smooth)


def dice_loss(logits, target, *, class_num=2, smooth=1, max_block_rows=None):
    """Mirror of the torch `dice_loss` helper, with the softmax fused in-kernel."""
    logits = logits.astype(jnp.float32)
    target = target.astype(jnp.int8)
    N, C, H, W = logits.shape
    assert 2 <= class_num <= 127 and C >= class_num
    K = class_num - 1
    HW = H * W

    if max_block_rows is None:
        # C channels per tile -> shrink the tile so VMEM stays modest on v7x.
        max_block_rows = max(256, ((8192 // C) // 32) * 32)

    rows, block_rows, T, needs_mask = _spatial_tiling(HW, max_block_rows)
    x_tiles = _lane_dense(logits.reshape(N, C, HW), HW, rows,
                          ((0, 0), (0, 0))).reshape(N, C, rows, 128)
    tgt_tiles = _lane_dense(target.reshape(N, HW), HW, rows,
                            ((0, 0),)).reshape(N, rows, 128)

    kernel = functools.partial(_dice_logits_kernel, class_num=class_num,
                               hw=HW, needs_mask=needs_mask)
    part_shape = jax.ShapeDtypeStruct((N, K, 128), jnp.float32)
    part_spec = pl.BlockSpec((1, K, 128), lambda n, t: (n, 0, 0))

    inter_p, psum_p, tsum_p = pl.pallas_call(
        kernel,
        out_shape=(part_shape, part_shape, part_shape),
        grid_spec=pltpu.PrefetchScalarGridSpec(
            num_scalar_prefetch=0,
            grid=(N, T),
            in_specs=[
                pl.BlockSpec((1, C, block_rows, 128),
                             lambda n, t: (n, 0, t, 0)),
                pl.BlockSpec((1, block_rows, 128),
                             lambda n, t: (n, t, 0)),
            ],
            out_specs=[part_spec, part_spec, part_spec],
        ),
        compiler_params=pltpu.CompilerParams(
            dimension_semantics=("parallel", "arbitrary"),
            vmem_limit_bytes=48 * 1024 * 1024,
        ),
    )(x_tiles, tgt_tiles)

    return _dice_combine(inter_p, psum_p, tsum_p, class_num, smooth)


# ----------------------------------------------------------------------------
# Pure-JAX reference (matches the PyTorch module).
# ----------------------------------------------------------------------------
def _dice_loss_reference(prob, target, *, class_num=2, smooth=1):
    prob = prob.astype(jnp.float32)
    targetf = target.astype(jnp.float32)
    dice_acc = jnp.float32(0.0)
    for i in range(1, class_num):
        p_i = prob[:, i, :, :]
        t_i = (targetf == jnp.float32(i)).astype(jnp.float32)
        intersect = jnp.sum(p_i * t_i)
        union = jnp.sum(p_i) + jnp.sum(t_i)
        dice = (2.0 * intersect + smooth) / (union + smooth)
        dice_acc = dice_acc + (1.0 - dice)
    return jnp.reshape(dice_acc / (class_num - 1), (1,))


if __name__ == "__main__":
    key = jax.random.PRNGKey(0)
    k1, k2, k3, k4 = jax.random.split(key, 4)

    # Case 1: mirrors the torch dice_loss helper (class_num=2), aligned spatial.
    N, C, H, W = 2, 2, 16, 16
    logits = jax.random.normal(k1, (N, C, H, W), dtype=jnp.float32)
    target = jax.random.randint(k2, (N, H, W), 0, 2).astype(jnp.int8)
    prob = jax.nn.softmax(logits, axis=1)

    out1 = jax.block_until_ready(dice_loss_pallas(prob, target, class_num=2, smooth=1))
    ref1 = _dice_loss_reference(prob, target, class_num=2, smooth=1)
    assert out1.shape == (1,)
    assert jnp.allclose(out1, ref1, rtol=1e-5, atol=1e-5), (out1, ref1)

    out1f = jax.block_until_ready(dice_loss(logits, target, class_num=2, smooth=1))
    assert jnp.allclose(out1f, ref1, rtol=1e-4, atol=1e-5), (out1f, ref1)

    # Case 2: multi-class + ragged spatial (H*W % 128 != 0) exercises the
    # in-kernel tail mask, target reuse across classes and the fused softmax.
    N2, C2, H2, W2, ncls = 1, 4, 10, 10, 4
    logits2 = jax.random.normal(k3, (N2, C2, H2, W2), dtype=jnp.float32)
    target2 = jax.random.randint(k4, (N2, H2, W2), 0, ncls).astype(jnp.int8)
    prob2 = jax.nn.softmax(logits2, axis=1)

    out2 = jax.block_until_ready(dice_loss_pallas(prob2, target2, class_num=ncls, smooth=1))
    ref2 = _dice_loss_reference(prob2, target2, class_num=ncls, smooth=1)
    assert jnp.allclose(out2, ref2, rtol=1e-5, atol=1e-5), (out2, ref2)

    out2f = jax.block_until_ready(dice_loss(logits2, target2, class_num=ncls, smooth=1))
    assert jnp.allclose(out2f, ref2, rtol=1e-4, atol=1e-5), (out2f, ref2)

    print("KERNEL_OK")
</pallas_src>

<mosaic_0001>
module attributes {stable_mosaic.version = 11 : i64} {
  func.func @_dice_prob_kernel(%arg0: i32, %arg1: i32, %arg2: i32, %arg3: memref<1x1x2x128xf32, #tpu.memory_space<vmem>>, %arg4: memref<1x2x128xi8, #tpu.memory_space<vmem>>, %arg5: memref<1x1x128xf32, #tpu.memory_space<vmem>>, %arg6: memref<1x1x128xf32, #tpu.memory_space<vmem>>, %arg7: memref<1x1x128xf32, #tpu.memory_space<vmem>>) attributes {dimension_semantics = [#tpu.dimension_semantics<parallel>, #tpu.dimension_semantics<arbitrary>, #tpu.dimension_semantics<arbitrary>], iteration_bounds = array<i64: 2, 1, 1>, scalar_prefetch = 0 : i64, scratch_operands = 0 : i64, tpu.core_type = #tpu.core_type<tc>, window_params = [{transform_indices = @transform_0, window_bounds = array<i64: 1, 1, 2, 128>}, {transform_indices = @transform_1, window_bounds = array<i64: 1, 2, 128>}, {transform_indices = @transform_2, window_bounds = array<i64: 1, 1, 128>}, {transform_indices = @transform_3, window_bounds = array<i64: 1, 1, 128>}, {transform_indices = @transform_4, window_bounds = array<i64: 1, 1, 128>}]} {
    %c0_i32 = arith.constant 0 : i32
    %0 = arith.cmpi eq, %arg1, %c0_i32 : i32
    %c0_i32_0 = arith.constant 0 : i32
    %1 = arith.cmpi eq, %arg2, %c0_i32_0 : i32
    %2 = arith.andi %0, %1 : i1
    %3 = arith.extui %2 : i1 to i32
    %c0_i32_1 = arith.constant 0 : i32
    %4 = arith.cmpi ne, %3, %c0_i32_1 : i32
    scf.if %4 {
      %cst_28 = arith.constant 0.000000e+00 : f32
      %48 = vector.broadcast %cst_28 : f32 to vector<1x1x128xf32>
      %c0_29 = arith.constant 0 : index
      %c0_30 = arith.constant 0 : index
      %c0_31 = arith.constant 0 : index
      %49 = vector.load %arg5[%c0_29, %c0_30, %c0_31] : memref<1x1x128xf32, #tpu.memory_space<vmem>>, vector<1x1x128xf32>
      tpu.vector_store %arg5[%c0_29, %c0_30, %c0_31], %48 {strides = array<i32>} : memref<1x1x128xf32, #tpu.memory_space<vmem>>, vector<1x1x128xf32>,
      %cst_32 = arith.constant 0.000000e+00 : f32
      %50 = vector.broadcast %cst_32 : f32 to vector<1x1x128xf32>
      %c0_33 = arith.constant 0 : index
      %c0_34 = arith.constant 0 : index
      %c0_35 = arith.constant 0 : index
      %51 = vector.load %arg6[%c0_33, %c0_34, %c0_35] : memref<1x1x128xf32, #tpu.memory_space<vmem>>, vector<1x1x128xf32>
      tpu.vector_store %arg6[%c0_33, %c0_34, %c0_35], %50 {strides = array<i32>} : memref<1x1x128xf32, #tpu.memory_space<vmem>>, vector<1x1x128xf32>,
      %cst_36 = arith.constant 0.000000e+00 : f32
      %52 = vector.broadcast %cst_36 : f32 to vector<1x1x128xf32>
      %c0_37 = arith.constant 0 : index
      %c0_38 = arith.constant 0 : index
      %c0_39 = arith.constant 0 : index
      %53 = vector.load %arg7[%c0_37, %c0_38, %c0_39] : memref<1x1x128xf32, #tpu.memory_space<vmem>>, vector<1x1x128xf32>
      tpu.vector_store %arg7[%c0_37, %c0_38, %c0_39], %52 {strides = array<i32>} : memref<1x1x128xf32, #tpu.memory_space<vmem>>, vector<1x1x128xf32>,
    } else {
    }
    %c0 = arith.constant 0 : index
    %c0_2 = arith.constant 0 : index
    %c0_3 = arith.constant 0 : index
    %c0_4 = arith.constant 0 : index
    %5 = vector.load %arg3[%c0, %c0_2, %c0_3, %c0_4] : memref<1x1x2x128xf32, #tpu.memory_space<vmem>>, vector<1x1x2x128xf32>
    %6 = vector.shape_cast %5 : vector<1x1x2x128xf32> to vector<2x128xf32>
    %c0_5 = arith.constant 0 : index
    %c0_6 = arith.constant 0 : index
    %c0_7 = arith.constant 0 : index
    %7 = vector.load %arg4[%c0_5, %c0_6, %c0_7] : memref<1x2x128xi8, #tpu.memory_space<vmem>>, vector<1x2x128xi8>
    %8 = vector.shape_cast %7 : vector<1x2x128xi8> to vector<2x128xi8>
    %9 = arith.extsi %8 : vector<2x128xi8> to vector<2x128xi32>
    %c1_i32 = arith.constant 1 : i32
    %10 = arith.addi %arg2, %c1_i32 : i32
    %11 = vector.broadcast %10 : i32 to vector<2x128xi32>
    %12 = arith.cmpi eq, %9, %11 : vector<2x128xi32>
    %13 = arith.extui %12 : vector<2x128xi1> to vector<2x128xi32>
    %14 = arith.sitofp %13 : vector<2x128xi32> to vector<2x128xf32>
    %15 = arith.mulf %6, %14 : vector<2x128xf32>
    %cst = arith.constant dense<0.000000e+00> : vector<128xf32>
    %16 = vector.multi_reduction <add>, %15, %cst [0] : vector<2x128xf32> to vector<128xf32>
    %17 = vector.shape_cast %16 : vector<128xf32> to vector<1x128xf32>
    %cst_8 = arith.constant dense<0.000000e+00> : vector<128xf32>
    %18 = vector.multi_reduction <add>, %6, %cst_8 [0] : vector<2x128xf32> to vector<128xf32>
    %19 = vector.shape_cast %18 : vector<128xf32> to vector<1x128xf32>
    %cst_9 = arith.constant dense<0.000000e+00> : vector<128xf32>
    %20 = vector.multi_reduction <add>, %14, %cst_9 [0] : vector<2x128xf32> to vector<128xf32>
    %21 = vector.shape_cast %20 : vector<128xf32> to vector<1x128xf32>
    %22 = tpu.iota {dimensions = array<i32: 0>} : vector<1x128xi32>
    %23 = vector.broadcast %arg2 : i32 to vector<1x128xi32>
    %24 = arith.cmpi eq, %22, %23 : vector<1x128xi32>
    %25 = arith.extui %24 : vector<1x128xi1> to vector<1x128xi32>
    %26 = arith.sitofp %25 : vector<1x128xi32> to vector<1x128xf32>
    %c0_10 = arith.constant 0 : index
    %c0_11 = arith.constant 0 : index
    %c0_12 = arith.constant 0 : index
    %27 = vector.load %arg5[%c0_10, %c0_11, %c0_12] : memref<1x1x128xf32, #tpu.memory_space<vmem>>, vector<1x1x128xf32>
    %28 = vector.shape_cast %27 : vector<1x1x128xf32> to vector<1x128xf32>
    %29 = arith.mulf %26, %17 : vector<1x128xf32>
    %30 = arith.addf %28, %29 : vector<1x128xf32>
    %c0_13 = arith.constant 0 : index
    %c0_14 = arith.constant 0 : index
    %c0_15 = arith.constant 0 : index
    %31 = vector.load %arg5[%c0_13, %c0_14, %c0_15] : memref<1x1x128xf32, #tpu.memory_space<vmem>>, vector<1x1x128xf32>
    %32 = vector.shape_cast %31 : vector<1x1x128xf32> to vector<1x128xf32>
    %33 = vector.shape_cast %30 : vector<1x128xf32> to vector<1x1x128xf32>
    tpu.vector_store %arg5[%c0_13, %c0_14, %c0_15], %33 {strides = array<i32>} : memref<1x1x128xf32, #tpu.memory_space<vmem>>, vector<1x1x128xf32>,
    %c0_16 = arith.constant 0 : index
    %c0_17 = arith.constant 0 : index
    %c0_18 = arith.constant 0 : index
    %34 = vector.load %arg6[%c0_16, %c0_17, %c0_18] : memref<1x1x128xf32, #tpu.memory_space<vmem>>, vector<1x1x128xf32>
    %35 = vector.shape_cast %34 : vector<1x1x128xf32> to vector<1x128xf32>
    %36 = arith.mulf %26, %19 : vector<1x128xf32>
    %37 = arith.addf %35, %36 : vector<1x128xf32>
    %c0_19 = arith.constant 0 : index
    %c0_20 = arith.constant 0 : index
    %c0_21 = arith.constant 0 : index
    %38 = vector.load %arg6[%c0_19, %c0_20, %c0_21] : memref<1x1x128xf32, #tpu.memory_space<vmem>>, vector<1x1x128xf32>
    %39 = vector.shape_cast %38 : vector<1x1x128xf32> to vector<1x128xf32>
    %40 = vector.shape_cast %37 : vector<1x128xf32> to vector<1x1x128xf32>
    tpu.vector_store %arg6[%c0_19, %c0_20, %c0_21], %40 {strides = array<i32>} : memref<1x1x128xf32, #tpu.memory_space<vmem>>, vector<1x1x128xf32>,
    %c0_22 = arith.constant 0 : index
    %c0_23 = arith.constant 0 : index
    %c0_24 = arith.constant 0 : index
    %41 = vector.load %arg7[%c0_22, %c0_23, %c0_24] : memref<1x1x128xf32, #tpu.memory_space<vmem>>, vector<1x1x128xf32>
    %42 = vector.shape_cast %41 : vector<1x1x128xf32> to vector<1x128xf32>
    %43 = arith.mulf %26, %21 : vector<1x128xf32>
    %44 = arith.addf %42, %43 : vector<1x128xf32>
    %c0_25 = arith.constant 0 : index
    %c0_26 = arith.constant 0 : index
    %c0_27 = arith.constant 0 : index
    %45 = vector.load %arg7[%c0_25, %c0_26, %c0_27] : memref<1x1x128xf32, #tpu.memory_space<vmem>>, vector<1x1x128xf32>
    %46 = vector.shape_cast %45 : vector<1x1x128xf32> to vector<1x128xf32>
    %47 = vector.shape_cast %44 : vector<1x128xf32> to vector<1x1x128xf32>
    tpu.vector_store %arg7[%c0_25, %c0_26, %c0_27], %47 {strides = array<i32>} : memref<1x1x128xf32, #tpu.memory_space<vmem>>, vector<1x1x128xf32>,
    return
  }
  func.func @transform_0(%arg0: i32, %arg1: i32, %arg2: i32) -> (i32, i32, i32, i32) {
    %c1_i32 = arith.constant 1 : i32
    %0 = arith.addi %arg2, %c1_i32 : i32
    %c0_i32 = arith.constant 0 : i32
    %c0_i32_0 = arith.constant 0 : i32
    return %arg0, %0, %arg1, %c0_i32 : i32, i32, i32, i32
  }
  func.func @transform_1(%arg0: i32, %arg1: i32, %arg2: i32) -> (i32, i32, i32) {
    %c0_i32 = arith.constant 0 : i32
    %c0_i32_0 = arith.constant 0 : i32
    return %arg0, %arg1, %c0_i32 : i32, i32, i32
  }
  func.func @transform_2(%arg0: i32, %arg1: i32, %arg2: i32) -> (i32, i32, i32) {
    %c0_i32 = arith.constant 0 : i32
    %c0_i32_0 = arith.constant 0 : i32
    %c0_i32_1 = arith.constant 0 : i32
    return %arg0, %c0_i32, %c0_i32_0 : i32, i32, i32
  }
  func.func @transform_3(%arg0: i32, %arg1: i32, %arg2: i32) -> (i32, i32, i32) {
    %c0_i32 = arith.constant 0 : i32
    %c0_i32_0 = arith.constant 0 : i32
    %c0_i32_1 = arith.constant 0 : i32
    return %arg0, %c0_i32, %c0_i32_0 : i32, i32, i32
  }
  func.func @transform_4(%arg0: i32, %arg1: i32, %arg2: i32) -> (i32, i32, i32) {
    %c0_i32 = arith.constant 0 : i32
    %c0_i32_0 = arith.constant 0 : i32
    %c0_i32_1 = arith.constant 0 : i32
    return %arg0, %c0_i32, %c0_i32_0 : i32, i32, i32
  }
}

</mosaic_0001>

<llo_original>
// kernel: tpu_custom_call.1
$region0: #{tpu_custom_call.1}
  #allocation0 [shape = 'u32[]', space=smem, size = 0x4, offset = 0x4, fixed_abs, tag = 'smem constant byte address 0x4 - core index']
  #allocation1 [shape = 'u32[144,128]{1,0:T(1,128)}', space=vmem, size = 0x12000, scoped, tag = 'internal scratch']
  %s0 = inlined_call_operand.hbm [shape: f32[2,2,2,128], index: 0, kind: input, shape index: {}]
  %s1 = inlined_call_operand.vmem [shape: s8[2,2,128], index: 1, kind: input, shape index: {}]
  %s2 = inlined_call_operand.hbm [shape: f32[2,1,128], index: 2, kind: output, shape index: {0}]
  %s3 = inlined_call_operand.hbm [shape: f32[2,1,128], index: 3, kind: output, shape index: {1}]
  %s4 = inlined_call_operand.hbm [shape: f32[2,1,128], index: 4, kind: output, shape index: {2}]
  %5 = xla_tuple %s2, %s3, %s4
  %s6 = sld [smem:[#allocation0]]
  $region65: #{tpu_custom_call.1} parent=0
    _
  %s8 = ssub.s32 1, %s6
  %s9 = scalar_select 0, %s8, %s6
  $region1: #{tpu_custom_call.1} parent=0
    #allocation2 [shape = 'u8[2048]{0}', space=vmem, size = 0x800, scoped, tag = 'input window, operand 0']
    #allocation3 [shape = 's32[2]{0}', space=sflag, size = 0x8, scoped, tag = 'scoped memory for tpu_custom_call.1']
    #allocation4 [shape = 's32[2]{0}', space=sflag, size = 0x8, scoped, tag = 'scoped memory for tpu_custom_call.1']
    #allocation5 [shape = 'u8[1024]{0}', space=vmem, size = 0x400, scoped, tag = 'output window, operand 0']
    #allocation6 [shape = 'u8[1024]{0}', space=vmem, size = 0x400, scoped, tag = 'output window, operand 1']
    #allocation7 [shape = 's32[2]{0}', space=sflag, size = 0x8, scoped, tag = 'scoped memory for tpu_custom_call.1']
    #allocation8 [shape = 'u8[1024]{0}', space=vmem, size = 0x400, scoped, tag = 'output window, operand 2']
    %10 = vsyncpa [#allocation3], 0
    %s11 = scalar_lea.sflag [#allocation3], 1
    %12 = vsyncpa %s11, 0
    %13 = vsyncpa [#allocation4], 0
    %s14 = scalar_lea.sflag [#allocation4], 1
    %15 = vsyncpa %s14, 0
    %16 = vsyncpa [#allocation7], 0
    %s17 = scalar_lea.sflag [#allocation7], 1
    %18 = vsyncpa %s17, 0
    loop: start=0, step=1, limit=4
    $region2: #{tpu_custom_call.1} parent=1 // loop_pre_header
      _
    $region3: #{tpu_custom_call.1} parent=1 // loop_header
      %s20 = sphi 0, %s24
      %p21 = scmp.ge.s32.totalorder %s20, 4
      %s27 = sphi 0, %s46
      %s28 = sphi 0, %s42
      %s29 = sphi 0, %s38
      %s30 = sphi 0, %s27
      %s31 = sphi 0, %s28
      %s32 = sphi 0, %s29
      %s33 = sphi 0, %s30
      %s34 = sphi 0, %s31
      %s35 = sphi 0, %s32
      %s55 = sphi 0, %s57
      %s58 = sphi 0, %s55
      %s59 = sphi 0, %s58
      %s75 = sphi 0, %s59
      %s83 = sphi 0, %s85
      %s86 = sphi 0, %s83
      %s87 = sphi 0, %s86
      %s103 = sphi 0, %s87
      %s109 = sphi 0, %s111
      %s112 = sphi 0, %s109
      %s113 = sphi 0, %s112
      %s129 = sphi 0, %s113
      %s135 = sphi 0, %s137
      %s138 = sphi 0, %s135
      %s139 = sphi 0, %s138
      %s155 = sphi 0, %s139
      %s161 = sphi 0, %s163
      %s164 = sphi 0, %s161
      %s165 = sphi 0, %s164
      %s181 = sphi 0, %s165
    $region4: #{tpu_custom_call.1} parent=1 // loop_header_branch
      %23 = sbr.rel (%p21) target = $region8
    $region5: #{tpu_custom_call.1} parent=1 // loop_body
      %s25 = ssub.s32 %s20, 1
      %s26 = ssub.s32 %s20, 2
      %s36 = sadd.s32 1, %s29
      %p37 = scmp.ge.s32.totalorder %s36, 1
      %s38 = scalar_select %p37, 0, %s36
      %s39 = sadd.s32 1, %s28
      %s40 = scalar_select %p37, %s39, %s28
      %p41 = scmp.ge.s32.totalorder %s40, 1
      %s42 = scalar_select %p41, 0, %s40
      %s43 = sadd.s32 1, %s27
      %s44 = scalar_select %p41, %s43, %s27
      %p45 = scmp.ge.s32.totalorder %s44, 2
      %s46 = scalar_select %p45, 0, %s44
      %s47 = sadd.s32 %s29, 1
      %s48 = sadd.s32 %s38, 1
      %s49 = ssub.s32 %s27, %s46
      %s50 = ssub.s32 %s47, %s48
      %s51 = sor.u32 %s49, %s50
      %s52 = ssub.s32 %s28, %s42
      %s53 = sor.u32 %s51, %s52
      %p54 = scmp.eq.s32.totalorder %s53, 0
      %s56 = sadd.s32 %s55, 1
      %s57 = scalar_select %p54, %s55, %s56
      %p60 = pneg %p54
      %p61 = scmp.eq.s32.totalorder %s20, 1
      %p62 = por %p60, %p61
      %p63 = scmp.ne.s32.totalorder %s55, %s58
      %p64 = scmp.eq.s32.totalorder %s20, 0
      %p65 = por %p63, %p64
      %p66 = scmp.ne.s32.totalorder %s55, %s58
      %p67 = scmp.eq.s32.totalorder %s25, 1
      %p68 = por %p66, %p67
      %p69 = scmp.ne.s32.totalorder %s58, %s59
      %p70 = scmp.eq.s32.totalorder %s25, 0
      %p71 = por %p69, %p70
      %p72 = scmp.ne.s32.totalorder %s58, %s59
      %p73 = scmp.eq.s32.totalorder %s26, 1
      %p74 = por %p72, %p73
      %p76 = scmp.ne.s32.totalorder %s59, %s75
      %p77 = scmp.eq.s32.totalorder %s26, 0
      %p78 = por %p76, %p77
      %s79 = ssub.s32 %s27, %s46
      %s80 = ssub.s32 %s28, %s42
      %s81 = sor.u32 %s79, %s80
      %p82 = scmp.eq.s32.totalorder %s81, 0
      %s84 = sadd.s32 %s83, 1
      %s85 = scalar_select %p82, %s83, %s84
      %p88 = pneg %p82
      %p89 = scmp.eq.s32.totalorder %s20, 1
      %p90 = por %p88, %p89
      %p91 = scmp.ne.s32.totalorder %s83, %s86
      %p92 = scmp.eq.s32.totalorder %s20, 0
      %p93 = por %p91, %p92
      %p94 = scmp.ne.s32.totalorder %s83, %s86
      %p95 = scmp.eq.s32.totalorder %s25, 1
      %p96 = por %p94, %p95
      %p97 = scmp.ne.s32.totalorder %s86, %s87
      %p98 = scmp.eq.s32.totalorder %s25, 0
      %p99 = por %p97, %p98
      %p100 = scmp.ne.s32.totalorder %s86, %s87
      %p101 = scmp.eq.s32.totalorder %s26, 1
      %p102 = por %p100, %p101
      %p104 = scmp.ne.s32.totalorder %s87, %s103
      %p105 = scmp.eq.s32.totalorder %s26, 0
      %p106 = por %p104, %p105
      %s107 = ssub.s32 %s27, %s46
      %p108 = scmp.eq.s32.totalorder %s107, 0
      %s110 = sadd.s32 %s109, 1
      %s111 = scalar_select %p108, %s109, %s110
      %p114 = pneg %p108
      %p115 = scmp.eq.s32.totalorder %s20, 1
      %p116 = por %p114, %p115
      %p117 = scmp.ne.s32.totalorder %s109, %s112
      %p118 = scmp.eq.s32.totalorder %s20, 0
      %p119 = por %p117, %p118
      %p120 = scmp.ne.s32.totalorder %s109, %s112
      %p121 = scmp.eq.s32.totalorder %s25, 1
      %p122 = por %p120, %p121
      %p123 = scmp.ne.s32.totalorder %s112, %s113
      %p124 = scmp.eq.s32.totalorder %s25, 0
      %p125 = por %p123, %p124
      %p126 = scmp.ne.s32.totalorder %s112, %s113
      %p127 = scmp.eq.s32.totalorder %s26, 1
      %p128 = por %p126, %p127
      %p130 = scmp.ne.s32.totalorder %s113, %s129
      %p131 = scmp.eq.s32.totalorder %s26, 0
      %p132 = por %p130, %p131
      %s133 = ssub.s32 %s27, %s46
      %p134 = scmp.eq.s32.totalorder %s133, 0
      %s136 = sadd.s32 %s135, 1
      %s137 = scalar_select %p134, %s135, %s136
      %p140 = pneg %p134
      %p141 = scmp.eq.s32.totalorder %s20, 1
      %p142 = por %p140, %p141
      %p143 = scmp.ne.s32.totalorder %s135, %s138
      %p144 = scmp.eq.s32.totalorder %s20, 0
      %p145 = por %p143, %p144
      %p146 = scmp.ne.s32.totalorder %s135, %s138
      %p147 = scmp.eq.s32.totalorder %s25, 1
      %p148 = por %p146, %p147
      %p149 = scmp.ne.s32.totalorder %s138, %s139
      %p150 = scmp.eq.s32.totalorder %s25, 0
      %p151 = por %p149, %p150
      %p152 = scmp.ne.s32.totalorder %s138, %s139
      %p153 = scmp.eq.s32.totalorder %s26, 1
      %p154 = por %p152, %p153
      %p156 = scmp.ne.s32.totalorder %s139, %s155
      %p157 = scmp.eq.s32.totalorder %s26, 0
      %p158 = por %p156, %p157
      %s159 = ssub.s32 %s27, %s46
      %p160 = scmp.eq.s32.totalorder %s159, 0
      %s162 = sadd.s32 %s161, 1
      %s163 = scalar_select %p160, %s161, %s162
      %p166 = pneg %p160
      %p167 = scmp.eq.s32.totalorder %s20, 1
      %p168 = por %p166, %p167
      %p169 = scmp.ne.s32.totalorder %s161, %s164
      %p170 = scmp.eq.s32.totalorder %s20, 0
      %p171 = por %p169, %p170
      %p172 = scmp.ne.s32.totalorder %s161, %s164
      %p173 = scmp.eq.s32.totalorder %s25, 1
      %p174 = por %p172, %p173
      %p175 = scmp.ne.s32.totalorder %s164, %s165
      %p176 = scmp.eq.s32.totalorder %s25, 0
      %p177 = por %p175, %p176
      %p178 = scmp.ne.s32.totalorder %s164, %s165
      %p179 = scmp.eq.s32.totalorder %s26, 1
      %p180 = por %p178, %p179
      %p182 = scmp.ne.s32.totalorder %s165, %s181
      %p183 = scmp.eq.s32.totalorder %s26, 0
      %p184 = por %p182, %p183
      %p185 = scmp.le.s32.totalorder 1, %s20
      %p186 = scmp.lt.s32.totalorder %s20, 3
      %p187 = pnand %p185, %p186
      %p188 = pneg %p187
      // Predicated region
      $region9: #{tpu_custom_call.1} parent=5 // pred_check
        _
      $region10: #{tpu_custom_call.1} parent=5 // pred_check_branch
        %190 = sbr.rel (%p187) target = $region12
      $region11: #{tpu_custom_call.1} parent=5 // pred_region
        %s191 = ssub.s32 %s20, 1
      $region12: #{tpu_custom_call.1} parent=5 // pred_fallthru
        _
      %p192 = scmp.lt.s32.totalorder %s20, 2
      // Predicated region
      $region13: #{tpu_custom_call.1} parent=5 // pred_check
        %p193 = pneg %p192
      $region14: #{tpu_custom_call.1} parent=5 // pred_check_branch
        %195 = sbr.rel (%p193) target = $region16
      $region15: #{tpu_custom_call.1} parent=5 // pred_region
        // Predicated region
        $region17: #{tpu_custom_call.1} parent=15 // pred_check
          %p196 = pneg %p65
        $region18: #{tpu_custom_call.1} parent=15 // pred_check_branch
          %198 = sbr.rel (%p196) target = $region20
        $region19: #{tpu_custom_call.1} parent=15 // pred_region
          %s199 = sand.u32 %s55, 1
          %s200 = scalar_lea.sflag [#allocation3], %s199
          %s201 = sand.u32 %s55, 1
          %s202 = smul.addr %s201, 2
          %s203 = scalar_lea.vmem [#allocation2], %s202
          %s204 = sadd.s32 %s29, 1
          %s206 = ssub.s32 32, 32
          %207 = vsyncadd %s200, %s206
          %s208 = sadd.s32 %s28, %s204
          %s209 = smul.addr %s27, 2
          %s210 = sadd.s32 %s208, %s209
          %s211 = smul.addr %s210, 32
          %s212 = scalar_lea.hbm %s0, %s211
          %s214 = sshll.u32 %s203, 4
          %s215 = int_to_ptr.vmem [resolvable:$true] %s214
          %217 = dma.hbm_to_vmem [thread:$0]  %s212, 32, %s215, %s200
        $region20: #{tpu_custom_call.1} parent=15 // pred_fallthru
          _
        // Predicated region
        $region21: #{tpu_custom_call.1} parent=15 // pred_check
          %p218 = pneg %p93
        $region22: #{tpu_custom_call.1} parent=15 // pred_check_branch
          %220 = sbr.rel (%p218) target = $region24
        $region23: #{tpu_custom_call.1} parent=15 // pred_region
          %p221 = scmp.lt.s32.totalorder %s27, 1
          %s222 = scalar_select %p221, %s27, 1
          %p223 = scmp.lt.s32.totalorder %s28, 0
          %s224 = scalar_select %p223, %s28, 0
          %s225 = sadd.s32 %s224, %s222
          %s226 = scalar_lea.vmem %s1, %s225
        $region24: #{tpu_custom_call.1} parent=15 // pred_fallthru
          _
      $region16: #{tpu_custom_call.1} parent=5 // pred_fallthru
        _
      %p227 = scmp.le.s32.totalorder 1, %s20
      %p228 = scmp.lt.s32.totalorder %s20, 3
      %p229 = pnand %p227, %p228
      %p230 = pneg %p229
      // Predicated region
      $region25: #{tpu_custom_call.1} parent=5 // pred_check
        _
      $region26: #{tpu_custom_call.1} parent=5 // pred_check_branch
        %232 = sbr.rel (%p229) target = $region28
      $region27: #{tpu_custom_call.1} parent=5 // pred_region
        %s233 = ssub.s32 %s20, 1
        %s234 = sand.u32 %s58, 1
        %s235 = scalar_lea.sflag [#allocation3], %s234
        %s236 = sand.u32 %s58, 1
        %s237 = smul.addr %s236, 2
        %s238 = scalar_lea.vmem [#allocation2], %s237
        // Predicated region
        $region29: #{tpu_custom_call.1} parent=27 // pred_check
          %p239 = pneg %p71
        $region30: #{tpu_custom_call.1} parent=27 // pred_check_branch
          %241 = sbr.rel (%p239) target = $region32
        $region31: #{tpu_custom_call.1} parent=27 // pred_region
          %242 = dma.done %s235, 32
        $region32: #{tpu_custom_call.1} parent=27 // pred_fallthru
          _
        %s243 = sand.u32 %s58, 1
        %s244 = scalar_lea.sflag [#allocation3], %s243
        %s245 = sand.u32 %s58, 1
        %s246 = smul.addr %s245, 2
        %s247 = scalar_lea.vmem [#allocation2], %s246
        %p248 = pneg %p71
        %p249 = pneg %p68
        %p250 = scmp.lt.s32.totalorder %s30, 1
        %s251 = scalar_select %p250, %s30, 1
        %p252 = scmp.lt.s32.totalorder %s31, 0
        %s253 = scalar_select %p252, %s31, 0
        %s254 = sadd.s32 %s253, %s251
        %s255 = scalar_lea.vmem %s1, %s254
        %p256 = pneg %p99
        %p257 = pneg %p96
        %p258 = pneg %p125
        %p259 = pneg %p122
        %s260 = sand.u32 %s112, 1
        %s261 = scalar_lea.sflag [#allocation4], %s260
        %s262 = sand.u32 %s112, 1
        %s263 = scalar_lea.vmem [#allocation5], %s262
        %p264 = pneg %p151
        %p265 = pneg %p148
        %s266 = sand.u32 %s25, 1
        %s267 = scalar_lea.sflag [#allocation7], %s266
        %s268 = sand.u32 %s138, 1
        %s269 = scalar_lea.vmem [#allocation6], %s268
        %p270 = pneg %p177
        %p271 = pneg %p174
        %s272 = sand.u32 %s25, 1
        %s273 = scalar_lea.sflag [#allocation7], %s272
        %s274 = sand.u32 %s164, 1
        %s275 = scalar_lea.vmem [#allocation8], %s274
        %s276 = sadd.s32 %s32, 1
        %p277 = scmp.lt.s32.totalorder %s30, 1
        %s278 = scalar_select %p277, %s30, 1
        %p279 = scmp.lt.s32.totalorder %s31, 0
        %s280 = scalar_select %p279, %s31, 0
        %s281 = sadd.s32 %s280, %s278
        %s282 = scalar_lea.vmem %s1, %s281
        %p283 = scmp.eq.s32.totalorder %s31, 0
        %p284 = scmp.eq.s32.totalorder %s32, 0
        %p285 = pnand %p283, %p284
        %p286 = pneg %p285
        // Predicated region
        $region33: #{tpu_custom_call.1} parent=27 // pred_check
          _
        $region34: #{tpu_custom_call.1} parent=27 // pred_check_branch
          %288 = sbr.rel (%p285) target = $region36
        $region35: #{tpu_custom_call.1} parent=27 // pred_region
          %289 = vst [vmem:[%s263] sm:$0x1] 0.0
          %290 = vst [vmem:[%s269] sm:$0x1] 0.0
          %291 = vst [vmem:[%s275] sm:$0x1] 0.0
        $region36: #{tpu_custom_call.1} parent=27 // pred_fallthru
          _
        %v292 = vld [vmem:[%s238] sm:$0x3]
        %v293 = vld [vmem:[%s282] sm:$0x1]
        %v294 = vunpack.c.0.s8 %v293
        %s295 = sadd.s32 %s32, 1
        %v296 = vstv %s295
        %vm297 = vcmp.eq.s32.totalorder %v294, %v296
        %v298 = vsel %vm297, 1, 0
        %v299 = vcvt.s32.f32 %v298
        %v300 = vmul.f32 %v292, %v299
        %vm301 = vcmask 1041408
        %v302 = vsel %vm301, %v300, 0.0
        %v303 = vrot.slane %v302, 4
        %v304 = vadd.f32 %v302, %v303
        %v305 = vrot.slane %v304, 2
        %v306 = vadd.f32 %v304, %v305
        %v307 = vrot.slane %v306, 1
        %v308 = vadd.f32 %v306, %v307
        %v309 = vsel %vm301, %v292, 0.0
        %v310 = vrot.slane %v309, 4
        %v311 = vadd.f32 %v309, %v310
        %v312 = vrot.slane %v311, 2
        %v313 = vadd.f32 %v311, %v312
        %v314 = vrot.slane %v313, 1
        %v315 = vadd.f32 %v313, %v314
        %v316 = vsel %vm301, %v299, 0.0
        %v317 = vrot.slane %v316, 4
        %v318 = vadd.f32 %v316, %v317
        %v319 = vrot.slane %v318, 2
        %v320 = vadd.f32 %v318, %v319
        %v321 = vrot.slane %v320, 1
        %v322 = vadd.f32 %v320, %v321
        %v323 = vlaneseq
        %v324 = vshrl.u32 %v323, 7
        %v325 = vstv %s32
        %vm326 = vcmp.eq.s32.totalorder %v324, %v325
        %v327 = vsel %vm326, 1, 0
        %v328 = vcvt.s32.f32 %v327
        %v329 = vld [vmem:[%s263] sm:$0x1]
        %v330 = vmul.f32 %v328, %v308
        %v331 = vadd.f32 %v329, %v330
        %332 = vst [vmem:[%s263] sm:$0x1] %v331
        %v333 = vld [vmem:[%s269] sm:$0x1]
        %v334 = vmul.f32 %v328, %v315
        %v335 = vadd.f32 %v333, %v334
        %336 = vst [vmem:[%s269] sm:$0x1] %v335
        %v337 = vld [vmem:[%s275] sm:$0x1]
        %v338 = vmul.f32 %v328, %v322
        %v339 = vadd.f32 %v337, %v338
        %340 = vst [vmem:[%s275] sm:$0x1] %v339
        %s341 = sand.u32 %s112, 1
        %s342 = scalar_lea.sflag [#allocation4], %s341
        %s343 = sand.u32 %s112, 1
        %s344 = scalar_lea.vmem [#allocation5], %s343
        %s345 = sand.u32 %s25, 1
        %s346 = scalar_lea.sflag [#allocation7], %s345
        %s347 = sand.u32 %s138, 1
        %s348 = scalar_lea.vmem [#allocation6], %s347
        %s349 = sand.u32 %s25, 1
        %s350 = scalar_lea.sflag [#allocation7], %s349
        %s351 = sand.u32 %s164, 1
        %s352 = scalar_lea.vmem [#allocation8], %s351
        // Predicated region
        $region37: #{tpu_custom_call.1} parent=27 // pred_check
          %p353 = pneg %p122
        $region38: #{tpu_custom_call.1} parent=27 // pred_check_branch
          %355 = sbr.rel (%p353) target = $region40
        $region39: #{tpu_custom_call.1} parent=27 // pred_region
          %s357 = ssub.s32 16, 16
          %358 = vsyncadd %s342, %s357
          %s359 = smul.addr %s30, 16
          %s360 = scalar_lea.hbm %s2, %s359
          %s362 = sshll.u32 %s344, 4
          %s363 = int_to_ptr.vmem [resolvable:$true] %s362
          %365 = dma.vmem_to_hbm [thread:$0]  %s363, 16, %s360, %s342
        $region40: #{tpu_custom_call.1} parent=27 // pred_fallthru
          _
        // Predicated region
        $region41: #{tpu_custom_call.1} parent=27 // pred_check
          %p366 = pneg %p148
        $region42: #{tpu_custom_call.1} parent=27 // pred_check_branch
          %368 = sbr.rel (%p366) target = $region44
        $region43: #{tpu_custom_call.1} parent=27 // pred_region
          %s370 = ssub.s32 16, 16
          %371 = vsyncadd %s346, %s370
          %s372 = smul.addr %s30, 16
          %s373 = scalar_lea.hbm %s3, %s372
          %s375 = sshll.u32 %s348, 4
          %s376 = int_to_ptr.vmem [resolvable:$true] %s375
          %378 = dma.vmem_to_hbm [thread:$0]  %s376, 16, %s373, %s346
        $region44: #{tpu_custom_call.1} parent=27 // pred_fallthru
          _
        // Predicated region
        $region45: #{tpu_custom_call.1} parent=27 // pred_check
          %p379 = pneg %p174
        $region46: #{tpu_custom_call.1} parent=27 // pred_check_branch
          %381 = sbr.rel (%p379) target = $region48
        $region47: #{tpu_custom_call.1} parent=27 // pred_region
          %s383 = ssub.s32 16, 16
          %384 = vsyncadd %s350, %s383
          %s385 = smul.addr %s30, 16
          %s386 = scalar_lea.hbm %s4, %s385
          %s388 = sshll.u32 %s352, 4
          %s389 = int_to_ptr.vmem [resolvable:$true] %s388
          %391 = dma.vmem_to_hbm [thread:$0]  %s389, 16, %s386, %s350
        $region48: #{tpu_custom_call.1} parent=27 // pred_fallthru
          _
      $region28: #{tpu_custom_call.1} parent=5 // pred_fallthru
        _
      %p392 = scmp.le.s32.totalorder 2, %s20
      // Predicated region
      $region49: #{tpu_custom_call.1} parent=5 // pred_check
        %p393 = pneg %p392
      $region50: #{tpu_custom_call.1} parent=5 // pred_check_branch
        %395 = sbr.rel (%p393) target = $region52
      $region51: #{tpu_custom_call.1} parent=5 // pred_region
        %s396 = ssub.s32 %s20, 2
        // Predicated region
        $region53: #{tpu_custom_call.1} parent=51 // pred_check
          %p397 = pneg %p128
        $region54: #{tpu_custom_call.1} parent=51 // pred_check_branch
          %399 = sbr.rel (%p397) target = $region56
        $region55: #{tpu_custom_call.1} parent=51 // pred_region
          %s400 = sand.u32 %s113, 1
          %s401 = scalar_lea.sflag [#allocation4], %s400
          %s402 = sand.u32 %s113, 1
          %s403 = scalar_lea.vmem [#allocation5], %s402
          %404 = dma.done %s401, 16
        $region56: #{tpu_custom_call.1} parent=51 // pred_fallthru
          _
        // Predicated region
        $region57: #{tpu_custom_call.1} parent=51 // pred_check
          %p405 = pneg %p154
        $region58: #{tpu_custom_call.1} parent=51 // pred_check_branch
          %407 = sbr.rel (%p405) target = $region60
        $region59: #{tpu_custom_call.1} parent=51 // pred_region
          %s408 = sand.u32 %s26, 1
          %s409 = scalar_lea.sflag [#allocation7], %s408
          %s410 = sand.u32 %s139, 1
          %s411 = scalar_lea.vmem [#allocation6], %s410
          %412 = dma.done %s409, 16
        $region60: #{tpu_custom_call.1} parent=51 // pred_fallthru
          _
        // Predicated region
        $region61: #{tpu_custom_call.1} parent=51 // pred_check
          %p413 = pneg %p180
        $region62: #{tpu_custom_call.1} parent=51 // pred_check_branch
          %415 = sbr.rel (%p413) target = $region64
        $region63: #{tpu_custom_call.1} parent=51 // pred_region
          %s416 = sand.u32 %s26, 1
          %s417 = scalar_lea.sflag [#allocation7], %s416
          %s418 = sand.u32 %s165, 1
          %s419 = scalar_lea.vmem [#allocation8], %s418
          %420 = dma.done %s417, 16
        $region64: #{tpu_custom_call.1} parent=51 // pred_fallthru
          _
      $region52: #{tpu_custom_call.1} parent=5 // pred_fallthru
        _
    $region6: #{tpu_custom_call.1} parent=1 // loop_footer
      %s24 = sadd.s32 1, %s20
    $region7: #{tpu_custom_call.1} parent=1 // loop_footer_branch
      %19 = sbr.rel target = $region3
    $region8: #{tpu_custom_call.1} parent=1 // loop_exit
      _
    %421 = vsyncpa [#allocation3], 1
    %s422 = scalar_lea.sflag [#allocation3], 1
    %423 = vsyncpa %s422, 1
    %424 = vsyncpa [#allocation4], 1
    %s425 = scalar_lea.sflag [#allocation4], 1
    %426 = vsyncpa %s425, 1
    %427 = vsyncpa [#allocation7], 1
    %s428 = scalar_lea.sflag [#allocation7], 1
    %429 = vsyncpa %s428, 1

</llo_original>
